<compile_context>
chip_gen: v7x
topology: tpu7x:2x2x1
jax: 0.10.0
libtpu: 0.0.40
codegen_flags: <defaults>
</compile_context>

<pallas_src>
import jax
import jax.numpy as jnp
from jax.experimental import pallas as pl
from jax.experimental.pallas import tpu as pltpu


def _highway_kernel(xk_ref, w_ref, b_ref, xr_ref, o_ref):
    """Grid = (outer, inner, k) with k (reduction) always last.

    xk_ref: (tm, tk) bf16   matmul LHS tile
    w_ref : (tk, tn) bf16   matmul RHS tile (pre-transposed weight)
    b_ref : (1,  tn) f32    bias
    xr_ref: (tm, tn) f32    residual x tile (same window as the output)
    o_ref : (tm, tn) f32    output tile, used as the f32 accumulator
    """
    k = pl.program_id(2)

    partial = jnp.dot(xk_ref[...], w_ref[...], preferred_element_type=jnp.float32)

    @pl.when(k == 0)
    def _init():
        o_ref[...] = partial

    @pl.when(k != 0)
    def _accum():
        o_ref[...] += partial

    @pl.when(k == pl.num_programs(2) - 1)
    def _epilogue():
        y = o_ref[...] + b_ref[...]                       # bias added once
        t = pl.reciprocal(1.0 + jnp.exp(-y), approx=True)  # sigmoid on the EUP
        h = jnp.maximum(y, 0.0)                           # relu of the same Linear
        x = xr_ref[...]
        # x + t*(h - x) == relu(y)*t + x*(1 - t)
        o_ref[...] = x + t * (h - x)


def _round_up(v, m):
    return -(-v // m) * m


def _pick_tile(padded_dim, max_tile, quantum):
    """padded_dim is a multiple of `quantum`.  Return the largest tile that is a
    multiple of `quantum`, divides padded_dim, and is <= max_tile."""
    if padded_dim <= max_tile:
        return padded_dim
    t = (max_tile // quantum) * quantum
    while t > quantum and padded_dim % t != 0:
        t -= quantum
    return t


def highway_forward(x, w, b, *, tm_max=512, tn_max=512, tk_max=2048):
    """x: (B, S) f32; w: (S_in, S_out) f32 (pre-transposed, kernel does x @ w);
    b: (S_out,) f32.  Returns (B, S_out) f32."""
    B, S_in = x.shape
    S_in_w, S_out = w.shape
    assert S_in == S_in_w and b.shape == (S_out,)
    assert S_in == S_out, "highway layer is a square Linear(size, size)"
    S = S_in

    # --- padded shapes (cdiv-style grid; padded rows/cols are sliced off) -------
    M_pad = _round_up(B, 16)        # 16 sublanes per bf16 vreg
    K_pad = _round_up(S, 128)       # lane-dense reduction dim
    N_pad = _round_up(S, 128)       # lane-dense output dim

    tm = _pick_tile(M_pad, tm_max, 16)
    tk = _pick_tile(K_pad, tk_max, 128)
    tn = _pick_tile(N_pad, tn_max, 128)

    n_i, n_j, n_k = M_pad // tm, N_pad // tn, K_pad // tk

    # --- pad + cast operands ----------------------------------------------------
    x_pad = jnp.pad(x, ((0, M_pad - B), (0, K_pad - S)))           # f32 (K_pad==N_pad)
    xk = x_pad.astype(jnp.bfloat16)                                  # matmul LHS (bf16)
    xr = x_pad                                                       # residual (f32)
    w_bf = jnp.pad(w, ((0, K_pad - S), (0, N_pad - S))).astype(jnp.bfloat16)
    b2d = jnp.pad(b, (0, N_pad - S)).reshape(1, N_pad)

    # --- grid ordering: re-stream whichever tensor costs less to re-read --------
    #   i-outer: W re-read (n_i - 1) extra times  -> extra ~ (n_i-1) * K*N
    #   j-outer: x re-read (n_j - 1) extra times  -> extra ~ (n_j-1) * M*K
    i_outer = (n_i - 1) * N_pad <= (n_j - 1) * M_pad
    if i_outer:
        grid = (n_i, n_j, n_k)
        xk_map = lambda i, j, k: (i, k)
        w_map = lambda i, j, k: (k, j)
        b_map = lambda i, j, k: (0, j)
        o_map = lambda i, j, k: (i, j)
    else:
        grid = (n_j, n_i, n_k)
        xk_map = lambda j, i, k: (i, k)
        w_map = lambda j, i, k: (k, j)
        b_map = lambda j, i, k: (0, j)
        o_map = lambda j, i, k: (i, j)

    # Worst-case double-buffered VMEM footprint (tm=512, tn=512, tk=2048):
    #   xk 2x2 MiB + w 2x2 MiB + xr 2x1 MiB + out 2x1 MiB ~= 12 MiB  -> 48 MiB is ample
    # and safe on v7x's 64 MiB physical VMEM.
    kernel = pl.pallas_call(
        _highway_kernel,
        out_shape=jax.ShapeDtypeStruct((M_pad, N_pad), jnp.float32),
        grid_spec=pltpu.PrefetchScalarGridSpec(
            num_scalar_prefetch=0,
            grid=grid,
            in_specs=[
                pl.BlockSpec((tm, tk), xk_map),   # x (bf16) for the matmul
                pl.BlockSpec((tk, tn), w_map),    # weight slice (bf16)
                pl.BlockSpec((1, tn), b_map),     # bias (f32)
                pl.BlockSpec((tm, tn), o_map),    # x (f32) for the residual blend
            ],
            out_specs=pl.BlockSpec((tm, tn), o_map),
        ),
        compiler_params=pltpu.CompilerParams(
            dimension_semantics=("parallel", "parallel", "arbitrary"),
            vmem_limit_bytes=48 * 1024 * 1024,
        ),
    )
    out_pad = kernel(xk, w_bf, b2d, xr)
    return out_pad[:B, :S]


def init_params(key, size):
    """Mimic nn.Linear default init: U[-1/sqrt(size), 1/sqrt(size)]."""
    kw, kb = jax.random.split(key)
    bound = 1.0 / (size ** 0.5)
    # PyTorch stores W as (out, in); build that, then transpose so the kernel does x @ W^T.
    w_oi = jax.random.uniform(kw, (size, size), jnp.float32, -bound, bound)
    b = jax.random.uniform(kb, (size,), jnp.float32, -bound, bound)
    return w_oi.T, b  # (in, out), (out,)


def reference_forward(x, w_t, b):
    y = x @ w_t + b
    t = jax.nn.sigmoid(y)
    return jnp.maximum(y, 0.0) * t + x * (1.0 - t)


if __name__ == "__main__":
    # bf16 MXU operands (vs the f32 reference) -> loose-ish tolerances.
    TOL = dict(atol=3e-2, rtol=3e-2)

    # --- small shape consistent with the module (correctness) -----------------
    k_x, k_p = jax.random.split(jax.random.PRNGKey(0))
    batch, size = 8, 32
    x = jax.random.normal(k_x, (batch, size), jnp.float32)
    w_t, b = init_params(k_p, size)
    out = jax.block_until_ready(highway_forward(x, w_t, b))
    ref = reference_forward(x, w_t, b)
    assert out.shape == (batch, size)
    assert jnp.allclose(out, ref, **TOL), "small-shape mismatch vs reference"

    # --- lane-dense shape exercising the tiled grid (n_i = 2) ------------------
    k_x2, k_p2 = jax.random.split(jax.random.PRNGKey(1))
    batch2, size2 = 1024, 512
    x2 = jax.random.normal(k_x2, (batch2, size2), jnp.float32)
    w2, b2 = init_params(k_p2, size2)
    out2 = jax.block_until_ready(highway_forward(x2, w2, b2))
    ref2 = reference_forward(x2, w2, b2)
    assert out2.shape == (batch2, size2)
    assert jnp.allclose(out2, ref2, **TOL), "tiled-shape mismatch vs reference"

    # --- awkward (non-multiple) shape exercising the padded path ---------------
    k_x3, k_p3 = jax.random.split(jax.random.PRNGKey(2))
    batch3, size3 = 200, 160
    x3 = jax.random.normal(k_x3, (batch3, size3), jnp.float32)
    w3, b3 = init_params(k_p3, size3)
    out3 = jax.block_until_ready(highway_forward(x3, w3, b3))
    ref3 = reference_forward(x3, w3, b3)
    assert out3.shape == (batch3, size3)
    assert jnp.allclose(out3, ref3, **TOL), "padded-shape mismatch vs reference"

    print("KERNEL_OK")
</pallas_src>

<mosaic_0001>
module attributes {stable_mosaic.version = 11 : i64} {
  func.func @_highway_kernel(%arg0: i32, %arg1: i32, %arg2: i32, %arg3: memref<16x128xbf16, #tpu.memory_space<vmem>>, %arg4: memref<128x128xbf16, #tpu.memory_space<vmem>>, %arg5: memref<1x128xf32, #tpu.memory_space<vmem>>, %arg6: memref<16x128xf32, #tpu.memory_space<vmem>>, %arg7: memref<16x128xf32, #tpu.memory_space<vmem>>) attributes {dimension_semantics = [#tpu.dimension_semantics<parallel>, #tpu.dimension_semantics<parallel>, #tpu.dimension_semantics<arbitrary>], iteration_bounds = array<i64: 1, 1, 1>, scalar_prefetch = 0 : i64, scratch_operands = 0 : i64, tpu.core_type = #tpu.core_type<tc>, window_params = [{transform_indices = @transform_0, window_bounds = array<i64: 16, 128>}, {transform_indices = @transform_1, window_bounds = array<i64: 128, 128>}, {transform_indices = @transform_2, window_bounds = array<i64: 1, 128>}, {transform_indices = @transform_3, window_bounds = array<i64: 16, 128>}, {transform_indices = @transform_4, window_bounds = array<i64: 16, 128>}]} {
    %c0 = arith.constant 0 : index
    %c0_0 = arith.constant 0 : index
    %0 = vector.load %arg3[%c0, %c0_0] : memref<16x128xbf16, #tpu.memory_space<vmem>>, vector<16x128xbf16>
    %c0_1 = arith.constant 0 : index
    %c0_2 = arith.constant 0 : index
    %1 = vector.load %arg4[%c0_1, %c0_2] : memref<128x128xbf16, #tpu.memory_space<vmem>>, vector<128x128xbf16>
    %cst = arith.constant dense<0.000000e+00> : vector<16x128xf32>
    %2 = tpu.matmul %0, %1, %cst {dimension_numbers = #tpu.dot_dimension_numbers<[1], [0], [0], [1], [0, 0, 1, 1], [], []>} : vector<16x128xbf16>, vector<128x128xbf16>, vector<16x128xf32> -> vector<16x128xf32>
    %c0_i32 = arith.constant 0 : i32
    %3 = arith.cmpi eq, %arg2, %c0_i32 : i32
    %4 = arith.extui %3 : i1 to i32
    %c0_i32_3 = arith.constant 0 : i32
    %5 = arith.cmpi ne, %4, %c0_i32_3 : i32
    scf.if %5 {
      %c0_8 = arith.constant 0 : index
      %c0_9 = arith.constant 0 : index
      %12 = vector.load %arg7[%c0_8, %c0_9] : memref<16x128xf32, #tpu.memory_space<vmem>>, vector<16x128xf32>
      tpu.vector_store %arg7[%c0_8, %c0_9], %2 {strides = array<i32>} : memref<16x128xf32, #tpu.memory_space<vmem>>, vector<16x128xf32>,
    } else {
    }
    %c0_i32_4 = arith.constant 0 : i32
    %6 = arith.cmpi ne, %arg2, %c0_i32_4 : i32
    %7 = arith.extui %6 : i1 to i32
    %c0_i32_5 = arith.constant 0 : i32
    %8 = arith.cmpi ne, %7, %c0_i32_5 : i32
    scf.if %8 {
      %c0_8 = arith.constant 0 : index
      %c0_9 = arith.constant 0 : index
      %12 = vector.load %arg7[%c0_8, %c0_9] : memref<16x128xf32, #tpu.memory_space<vmem>>, vector<16x128xf32>
      %13 = arith.addf %12, %2 : vector<16x128xf32>
      %c0_10 = arith.constant 0 : index
      %c0_11 = arith.constant 0 : index
      %14 = vector.load %arg7[%c0_10, %c0_11] : memref<16x128xf32, #tpu.memory_space<vmem>>, vector<16x128xf32>
      tpu.vector_store %arg7[%c0_10, %c0_11], %13 {strides = array<i32>} : memref<16x128xf32, #tpu.memory_space<vmem>>, vector<16x128xf32>,
    } else {
    }
    %c0_i32_6 = arith.constant 0 : i32
    %9 = arith.cmpi eq, %arg2, %c0_i32_6 : i32
    %10 = arith.extui %9 : i1 to i32
    %c0_i32_7 = arith.constant 0 : i32
    %11 = arith.cmpi ne, %10, %c0_i32_7 : i32
    scf.if %11 {
      %c0_8 = arith.constant 0 : index
      %c0_9 = arith.constant 0 : index
      %12 = vector.load %arg7[%c0_8, %c0_9] : memref<16x128xf32, #tpu.memory_space<vmem>>, vector<16x128xf32>
      %c0_10 = arith.constant 0 : index
      %c0_11 = arith.constant 0 : index
      %13 = vector.load %arg5[%c0_10, %c0_11] : memref<1x128xf32, #tpu.memory_space<vmem>>, vector<1x128xf32>
      %14 = vector.broadcast %13 : vector<1x128xf32> to vector<16x128xf32>
      %15 = arith.addf %12, %14 : vector<16x128xf32>
      %cst_12 = arith.constant 0.000000e+00 : f32
      %16 = vector.broadcast %cst_12 : f32 to vector<16x128xf32>
      %17 = arith.subf %16, %15 : vector<16x128xf32>
      %18 = math.exp %17 : vector<16x128xf32>
      %cst_13 = arith.constant 1.000000e+00 : f32
      %19 = vector.broadcast %cst_13 : f32 to vector<16x128xf32>
      %20 = arith.addf %19, %18 : vector<16x128xf32>
      %21 = tpu.reciprocal %20 {approx = true} : vector<16x128xf32> -> vector<16x128xf32>
      %cst_14 = arith.constant 0.000000e+00 : f32
      %22 = vector.broadcast %cst_14 : f32 to vector<16x128xf32>
      %23 = arith.maximumf %15, %22 : vector<16x128xf32>
      %c0_15 = arith.constant 0 : index
      %c0_16 = arith.constant 0 : index
      %24 = vector.load %arg6[%c0_15, %c0_16] : memref<16x128xf32, #tpu.memory_space<vmem>>, vector<16x128xf32>
      %25 = arith.subf %23, %24 : vector<16x128xf32>
      %26 = arith.mulf %21, %25 : vector<16x128xf32>
      %27 = arith.addf %24, %26 : vector<16x128xf32>
      %c0_17 = arith.constant 0 : index
      %c0_18 = arith.constant 0 : index
      %28 = vector.load %arg7[%c0_17, %c0_18] : memref<16x128xf32, #tpu.memory_space<vmem>>, vector<16x128xf32>
      tpu.vector_store %arg7[%c0_17, %c0_18], %27 {strides = array<i32>} : memref<16x128xf32, #tpu.memory_space<vmem>>, vector<16x128xf32>,
    } else {
    }
    return
  }
  func.func @transform_0(%arg0: i32, %arg1: i32, %arg2: i32) -> (i32, i32) {
    %c0_i32 = arith.constant 0 : i32
    return %arg0, %arg2 : i32, i32
  }
  func.func @transform_1(%arg0: i32, %arg1: i32, %arg2: i32) -> (i32, i32) {
    %c0_i32 = arith.constant 0 : i32
    return %arg2, %arg1 : i32, i32
  }
  func.func @transform_2(%arg0: i32, %arg1: i32, %arg2: i32) -> (i32, i32) {
    %c0_i32 = arith.constant 0 : i32
    %c0_i32_0 = arith.constant 0 : i32
    return %c0_i32, %arg1 : i32, i32
  }
  func.func @transform_3(%arg0: i32, %arg1: i32, %arg2: i32) -> (i32, i32) {
    %c0_i32 = arith.constant 0 : i32
    return %arg0, %arg1 : i32, i32
  }
  func.func @transform_4(%arg0: i32, %arg1: i32, %arg2: i32) -> (i32, i32) {
    %c0_i32 = arith.constant 0 : i32
    return %arg0, %arg1 : i32, i32
  }
}

</mosaic_0001>

<llo_original>
// kernel: tpu_custom_call.1
$region0: #{tpu_custom_call.1}
  #allocation0 [shape = 'u32[]', space=smem, size = 0x4, offset = 0x4, fixed_abs, tag = 'smem constant byte address 0x4 - core index']
  #allocation1 [shape = 'u32[144,128]{1,0:T(1,128)}', space=vmem, size = 0x12000, scoped, tag = 'internal scratch']
  %s0 = inlined_call_operand.hbm [shape: bf16[16,128], index: 0, kind: input, shape index: {}]
  %s1 = inlined_call_operand.hbm [shape: bf16[128,128], index: 1, kind: input, shape index: {}]
  %s2 = inlined_call_operand.vmem [shape: f32[1,128], index: 2, kind: input, shape index: {}]
  %s3 = inlined_call_operand.hbm [shape: f32[16,128], index: 3, kind: input, shape index: {}]
  %s4 = inlined_call_operand.hbm [shape: f32[16,128], index: 4, kind: output, shape index: {}]
  %s5 = sld [smem:[#allocation0]]
  $region50: #{tpu_custom_call.1} parent=0
    _
  %s7 = ssub.s32 1, %s5
  %s8 = scalar_select 0, %s7, %s5
  $region1: #{tpu_custom_call.1} parent=0
    #allocation2 [shape = 'u8[4096]{0}', space=vmem, size = 0x1000, scoped, tag = 'input window, operand 0, single buffered']
    #allocation3 [shape = 's32[1]{0}', space=sflag, size = 0x4, scoped, tag = 'scoped memory for tpu_custom_call.1']
    #allocation4 [shape = 's32[1]{0}', space=sflag, size = 0x4, scoped, tag = 'scoped memory for tpu_custom_call.1']
    #allocation5 [shape = 'u8[32768]{0}', space=vmem, size = 0x8000, scoped, tag = 'input window, operand 1, single buffered']
    #allocation6 [shape = 's32[1]{0}', space=sflag, size = 0x4, scoped, tag = 'scoped memory for tpu_custom_call.1']
    #allocation7 [shape = 'u8[8192]{0}', space=vmem, size = 0x2000, scoped, tag = 'input window, operand 3, single buffered']
    #allocation8 [shape = 'u8[8192]{0}', space=vmem, size = 0x2000, scoped, tag = 'output window, operand 0, single buffered']
    %9 = vsyncpa [#allocation3], 0
    %10 = vsyncpa [#allocation6], 0
    %11 = vsyncpa [#allocation4], 0
    // Predicated region
    $region2: #{tpu_custom_call.1} parent=1 // pred_check
      _
    $region3: #{tpu_custom_call.1} parent=1 // pred_check_branch
      %13 = sbr.rel (0) target = $region5
    $region4: #{tpu_custom_call.1} parent=1 // pred_region
      %s15 = ssub.s32 128, 128
      %16 = vsyncadd [#allocation3], %s15
      %s17 = sshll.u32 [#allocation2], 4
      %s18 = int_to_ptr.vmem [resolvable:$true] %s17
      %23 = dma.hbm_to_vmem [thread:$0]  %s0, 128, %s18, [#allocation3], 64, 64, 4
    $region5: #{tpu_custom_call.1} parent=1 // pred_fallthru
      _
    // Predicated region
    $region6: #{tpu_custom_call.1} parent=1 // pred_check
      _
    $region7: #{tpu_custom_call.1} parent=1 // pred_check_branch
      %25 = sbr.rel (0) target = $region9
    $region8: #{tpu_custom_call.1} parent=1 // pred_region
      %s27 = ssub.s32 1024, 1024
      %28 = vsyncadd [#allocation6], %s27
      %s29 = sshll.u32 [#allocation5], 4
      %s30 = int_to_ptr.vmem [resolvable:$true] %s29
      %35 = dma.hbm_to_vmem [thread:$0]  %s1, 1024, %s30, [#allocation6], 64, 64, 4
    $region9: #{tpu_custom_call.1} parent=1 // pred_fallthru
      _
    // Predicated region
    $region10: #{tpu_custom_call.1} parent=1 // pred_check
      _
    $region11: #{tpu_custom_call.1} parent=1 // pred_check_branch
      %37 = sbr.rel (0) target = $region13
    $region12: #{tpu_custom_call.1} parent=1 // pred_region
      _
    $region13: #{tpu_custom_call.1} parent=1 // pred_fallthru
      _
    // Predicated region
    $region14: #{tpu_custom_call.1} parent=1 // pred_check
      _
    $region15: #{tpu_custom_call.1} parent=1 // pred_check_branch
      %39 = sbr.rel (0) target = $region17
    $region16: #{tpu_custom_call.1} parent=1 // pred_region
      %s41 = ssub.s32 256, 256
      %42 = vsyncadd [#allocation6], %s41
      %s43 = sshll.u32 [#allocation7], 4
      %s44 = int_to_ptr.vmem [resolvable:$true] %s43
      %49 = dma.hbm_to_vmem [thread:$0]  %s3, 256, %s44, [#allocation6], 128, 128, 8
    $region17: #{tpu_custom_call.1} parent=1 // pred_fallthru
      _
    // Predicated region
    $region18: #{tpu_custom_call.1} parent=1 // pred_check
      _
    $region19: #{tpu_custom_call.1} parent=1 // pred_check_branch
      %51 = sbr.rel (0) target = $region21
    $region20: #{tpu_custom_call.1} parent=1 // pred_region
      %52 = dma.done [#allocation3], 128
    $region21: #{tpu_custom_call.1} parent=1 // pred_fallthru
      _
    // Predicated region
    $region22: #{tpu_custom_call.1} parent=1 // pred_check
      _
    $region23: #{tpu_custom_call.1} parent=1 // pred_check_branch
      %54 = sbr.rel (0) target = $region25
    $region24: #{tpu_custom_call.1} parent=1 // pred_region
      %55 = dma.done [#allocation6], 1024
    $region25: #{tpu_custom_call.1} parent=1 // pred_fallthru
      _
    // Predicated region
    $region26: #{tpu_custom_call.1} parent=1 // pred_check
      _
    $region27: #{tpu_custom_call.1} parent=1 // pred_check_branch
      %57 = sbr.rel (0) target = $region29
    $region28: #{tpu_custom_call.1} parent=1 // pred_region
      %58 = dma.done [#allocation6], 256
    $region29: #{tpu_custom_call.1} parent=1 // pred_fallthru
      _
    %v60 = vld [vmem:[#allocation2] sm:$0xf]
    %v61 = vld [vmem:[#allocation2 + $0x4] sm:$0xf]
    %v62 = vld [vmem:[#allocation5] sm:$0xf]
    %v63 = vld [vmem:[#allocation5 + $0x4] sm:$0xf]
    %v64 = vld [vmem:[#allocation5 + $0x8] sm:$0xf]
    %v65 = vld [vmem:[#allocation5 + $0xc] sm:$0xf]
    %v66 = vld [vmem:[#allocation5 + $0x10] sm:$0xf]
    %v67 = vld [vmem:[#allocation5 + $0x14] sm:$0xf]
    %v68 = vld [vmem:[#allocation5 + $0x18] sm:$0xf]
    %v69 = vld [vmem:[#allocation5 + $0x1c] sm:$0xf]
    %v70 = vld [vmem:[#allocation5 + $0x20] sm:$0xf]
    %v71 = vld [vmem:[#allocation5 + $0x24] sm:$0xf]
    %v72 = vld [vmem:[#allocation5 + $0x28] sm:$0xf]
    %v73 = vld [vmem:[#allocation5 + $0x2c] sm:$0xf]
    %v74 = vld [vmem:[#allocation5 + $0x30] sm:$0xf]
    %v75 = vld [vmem:[#allocation5 + $0x34] sm:$0xf]
    %v76 = vld [vmem:[#allocation5 + $0x38] sm:$0xf]
    %v77 = vld [vmem:[#allocation5 + $0x3c] sm:$0xf]
    %v80 = vunpack.c.l.b16 %v60
    %v81 = vunpack.c.l.b16 %v61
    %v82 = vpack.c.b16 %v81, %v80
    %v100 = vunpack.c.l.b16 %v62
    %v101 = vunpack.c.l.b16 %v63
    %v102 = vunpack.c.l.b16 %v64
    %v103 = vunpack.c.l.b16 %v65
    %v104 = vunpack.c.l.b16 %v66
    %v105 = vunpack.c.l.b16 %v67
    %v106 = vunpack.c.l.b16 %v68
    %v107 = vunpack.c.l.b16 %v69
    %v108 = vunpack.c.l.b16 %v70
    %v109 = vunpack.c.l.b16 %v71
    %v110 = vunpack.c.l.b16 %v72
    %v111 = vunpack.c.l.b16 %v73
    %v112 = vunpack.c.l.b16 %v74
    %v113 = vunpack.c.l.b16 %v75
    %v114 = vunpack.c.l.b16 %v76
    %v115 = vunpack.c.l.b16 %v77
    %v116 = vpack.c.b16 %v101, %v100
    %v117 = vpack.c.b16 %v103, %v102
    %v118 = vpack.c.b16 %v105, %v104
    %v119 = vpack.c.b16 %v107, %v106
    %v120 = vpack.c.b16 %v109, %v108
    %v121 = vpack.c.b16 %v111, %v110
    %v122 = vpack.c.b16 %v113, %v112
    %v123 = vpack.c.b16 %v115, %v114
    %132 = vmatprep.subr.bf16.mxu0 0
    %133 = vmatpush1.bf16.msra.mxu0 %v116
    %134 = vmatprep.subr.bf16.mxu0 0
    %135 = vmatpush1.bf16.msra.mxu0 %v117
    %136 = vmatprep.subr.bf16.mxu0 0
    %137 = vmatpush1.bf16.msra.mxu0 %v118
    %138 = vmatprep.subr.bf16.mxu0 0
    %139 = vmatpush1.bf16.msra.mxu0 %v119
    %140 = vmatprep.subr.bf16.mxu0 0
    %141 = vmatpush1.bf16.msra.mxu0 %v120
    %142 = vmatprep.subr.bf16.mxu0 0
    %143 = vmatpush1.bf16.msra.mxu0 %v121
    %144 = vmatprep.subr.bf16.mxu0 0
    %145 = vmatpush1.bf16.msra.mxu0 %v122
    %146 = vmatprep.subr.bf16.mxu0 0
    %147 = vmatpush1.bf16.msra.mxu0 %v123
    %148 = vmatprep.subr.bf16.mxu0 0
    %149 = vmatpush1.bf16.msra.mxu0 0
    %150 = vmatprep.subr.bf16.mxu0 0
    %151 = vmatpush1.bf16.msra.mxu0 0
    %152 = vmatprep.subr.bf16.mxu0 0
    %153 = vmatpush1.bf16.msra.mxu0 0
    %154 = vmatprep.subr.bf16.mxu0 0
    %155 = vmatpush1.bf16.msra.mxu0 0
    %156 = vmatprep.subr.bf16.mxu0 0
    %157 = vmatpush1.bf16.msra.mxu0 0
    %158 = vmatprep.subr.bf16.mxu0 0
    %159 = vmatpush1.bf16.msra.mxu0 0
    %160 = vmatprep.subr.bf16.mxu0 0
    %161 = vmatpush1.bf16.msra.mxu0 0
    %162 = vmatprep.subr.bf16.mxu0 0
    %163 = vmatpush1.bf16.msra.mxu0 0
    %164 = vmatprep.mubr.bf16.mxu0 0
    %165 = vmatmul.mubr.bf16.gmra.mrb[0].mxu0 %v82
    %v166 = vpop.f32.mrb[0].mxu0
    %v167 = vadd.f32 0.0, %v166
    %v168 = vpop.f32.mrb[0].mxu0
    %v169 = vpop.f32.mrb[0].mxu0
    %v170 = vadd.f32 0.0, %v169
    %v171 = vpop.f32.mrb[0].mxu0
    %172 = vdwg.mxu0
    %p173 = scmp.eq.s32.totalorder 0, 0
    // Predicated region
    $region30: #{tpu_custom_call.1} parent=1 // pred_check
      %p174 = pneg %p173
    $region31: #{tpu_custom_call.1} parent=1 // pred_check_branch
      %176 = sbr.rel (%p174) target = $region33
    $region32: #{tpu_custom_call.1} parent=1 // pred_region
      %177 = vst [vmem:[#allocation8] sm:$0xff] %v167
      %178 = vst [vmem:[#allocation8 + $0x8] sm:$0xff] %v170
    $region33: #{tpu_custom_call.1} parent=1 // pred_fallthru
      _
    %p179 = scmp.ne.s32.totalorder 0, 0
    // Predicated region
    $region34: #{tpu_custom_call.1} parent=1 // pred_check
      %p180 = pneg %p179
    $region35: #{tpu_custom_call.1} parent=1 // pred_check_branch
      %182 = sbr.rel (%p180) target = $region37
    $region36: #{tpu_custom_call.1} parent=1 // pred_region
      %v183 = vld [vmem:[#allocation8] sm:$0xff]
      %v184 = vld [vmem:[#allocation8 + $0x8] sm:$0xff]
      %v185 = vadd.f32 %v183, %v167
      %v186 = vadd.f32 %v184, %v170
      %187 = vst [vmem:[#allocation8] sm:$0xff] %v185
      %188 = vst [vmem:[#allocation8 + $0x8] sm:$0xff] %v186
    $region37: #{tpu_custom_call.1} parent=1 // pred_fallthru
      _
    // Predicated region
    $region38: #{tpu_custom_call.1} parent=1 // pred_check
      %p189 = pneg %p173
    $region39: #{tpu_custom_call.1} parent=1 // pred_check_branch
      %191 = sbr.rel (%p189) target = $region41
    $region40: #{tpu_custom_call.1} parent=1 // pred_region
      %v192 = vld [vmem:[#allocation8] sm:$0xff]
      %v193 = vld [vmem:[#allocation8 + $0x8] sm:$0xff]
      %v194 = vld [vmem:[%s2] sm:$0x1]
      %v196 = vlaneseq
      %v197 = vshrl.u32 %v196, 7
      %v198 = vsub.s32 0, %v197
      %v199 = vrot.slane %v194, %v198
      %v201 = vadd.f32 %v192, %v199
      %v202 = vadd.f32 %v193, %v199
      %v203 = vsub.f32 0.0, %v201
      %v204 = vsub.f32 0.0, %v202
      %v205 = vmul.f32 %v203, 1.442695
      %v206 = vpow.pop %v205
      %v207 = vmul.f32 %v204, 1.442695
      %v208 = vpow.pop %v207
      %v209 = vadd.f32 %v206, 1.0
      %v210 = vadd.f32 %v208, 1.0
      %v211 = vrcp.pop %v209
      %v212 = vrcp.pop %v210
      %v213 = vmax.f32 %v201, 0.0
      %v214 = vmax.f32 %v202, 0.0
      %v215 = vld [vmem:[#allocation7] sm:$0xff]
      %v216 = vld [vmem:[#allocation7 + $0x8] sm:$0xff]
      %v217 = vsub.f32 %v213, %v215
      %v218 = vsub.f32 %v214, %v216
      %v219 = vmul.f32 %v211, %v217
      %v220 = vmul.f32 %v212, %v218
      %v221 = vadd.f32 %v215, %v219
      %v222 = vadd.f32 %v216, %v220
      %223 = vst [vmem:[#allocation8] sm:$0xff] %v221
      %224 = vst [vmem:[#allocation8 + $0x8] sm:$0xff] %v222
    $region41: #{tpu_custom_call.1} parent=1 // pred_fallthru
      _
    // Predicated region
    $region42: #{tpu_custom_call.1} parent=1 // pred_check
      _
    $region43: #{tpu_custom_call.1} parent=1 // pred_check_branch
      %226 = sbr.rel (0) target = $region45
    $region44: #{tpu_custom_call.1} parent=1 // pred_region
      %s228 = ssub.s32 256, 256
      %229 = vsyncadd [#allocation4], %s228
      %s230 = sshll.u32 [#allocation8], 4
      %s231 = int_to_ptr.vmem [resolvable:$true] %s230
      %236 = dma.vmem_to_hbm [thread:$0]  %s231, 256, %s4, [#allocation4], 128, 128, 8
    $region45: #{tpu_custom_call.1} parent=1 // pred_fallthru
      _
    // Predicated region
    $region46: #{tpu_custom_call.1} parent=1 // pred_check
      _
    $region47: #{tpu_custom_call.1} parent=1 // pred_check_branch
      %238 = sbr.rel (0) target = $region49
    $region48: #{tpu_custom_call.1} parent=1 // pred_region
      %239 = dma.done [#allocation4], 256
    $region49: #{tpu_custom_call.1} parent=1 // pred_fallthru
      _
    %240 = vsyncpa [#allocation3], 1
    %241 = vsyncpa [#allocation6], 1
    %242 = vsyncpa [#allocation4], 1

</llo_original>
